<compile_context>
chip_gen: v6e
topology: v6e:2x2x1
jax: 0.10.0
libtpu: 0.0.40
codegen_flags: <defaults>
</compile_context>

<pallas_src>
import functools

import jax
import jax.numpy as jnp
from jax.experimental import pallas as pl
from jax.experimental.pallas import tpu as pltpu

_LANE = 128                              # minimum lane width
_TARGET_BLOCK_BYTES = 2 * 1024 * 1024    # ~2 MiB per block
_SUBLANE = {4: 8, 2: 16, 1: 32}          # sublane multiple per itemsize


def _hardtanh_kernel(x_ref, o_ref, *, min_val, max_val):
    x = x_ref[...]
    lo = jnp.asarray(min_val, dtype=x.dtype)
    hi = jnp.asarray(max_val, dtype=x.dtype)
    # HardTanh == clip: one max + one min on the VPU, stays memory-bound.
    o_ref[...] = jnp.minimum(jnp.maximum(x, lo), hi)


def hardtanh(x: jax.Array, min_val: float = -1.0, max_val: float = 1.0) -> jax.Array:
    """HardTanh forward: elementwise clip(x, min_val, max_val); same shape & dtype."""
    orig_shape = x.shape
    dtype = x.dtype
    n = x.size
    if n == 0:
        return x

    itemsize = jnp.dtype(dtype).itemsize
    sub = _SUBLANE.get(itemsize, 8)

    # ---- choose a lane-dense 2-D slab layout (reshape of contiguous data is free) ----
    lane = None
    for cand in (2048, 1024, 512, 256, _LANE):
        if n % cand == 0 and n // cand >= sub:
            lane = cand
            break

    pad = 0
    if lane is None:
        lane = _LANE
        if n % lane != 0:
            # Ragged tail: only here do we pay one pad + one slice pass.
            pad = lane - (n % lane)

    x_flat = x.reshape(-1)
    if pad:
        x_flat = jnp.pad(x_flat, (0, pad))
    rows = (n + pad) // lane
    x2d = x_flat.reshape(rows, lane)

    # ---- pick the row tile: biggest ~2 MiB block, sublane-aligned ----
    if rows <= sub:
        row_tile = rows  # full-extent block along rows (always legal)
    else:
        row_tile = max(sub, min(_TARGET_BLOCK_BYTES // (lane * itemsize), rows))
        row_tile = max(sub, (row_tile // sub) * sub)
        # Keep >= 2 grid steps on non-trivial inputs so v7x can use both TensorCores.
        if (pl.cdiv(rows, row_tile) == 1 and rows >= 2 * sub
                and n * itemsize >= (1 << 20)):
            row_tile = max(sub, pl.cdiv(pl.cdiv(rows, 2), sub) * sub)

    grid = (pl.cdiv(rows, row_tile),)
    kernel = functools.partial(_hardtanh_kernel,
                               min_val=float(min_val), max_val=float(max_val))

    out2d = pl.pallas_call(
        kernel,
        out_shape=jax.ShapeDtypeStruct((rows, lane), dtype),
        grid_spec=pltpu.PrefetchScalarGridSpec(
            num_scalar_prefetch=0,
            grid=grid,
            in_specs=[pl.BlockSpec((row_tile, lane), lambda i: (i, 0))],
            out_specs=pl.BlockSpec((row_tile, lane), lambda i: (i, 0)),
        ),
        compiler_params=pltpu.CompilerParams(
            dimension_semantics=("parallel",),
        ),
    )(x2d)

    out_flat = out2d.reshape(rows * lane)
    if pad:
        out_flat = out_flat[:n]
    return out_flat.reshape(orig_shape)


if __name__ == "__main__":
    key = jax.random.PRNGKey(0)

    # Small NCHW-style activation; scale so plenty of values fall outside [-1, 1].
    x = 2.0 * jax.random.normal(key, (2, 4, 16, 16), dtype=jnp.float32)
    y = hardtanh(x, min_val=-1.0, max_val=1.0)
    jax.block_until_ready(y)
    ref = jnp.clip(x, -1.0, 1.0)
    assert y.shape == x.shape and y.dtype == x.dtype
    assert jnp.allclose(y, ref), "mismatch vs reference (aligned case)"

    # Lane-unaligned element count exercises the ragged-tail fallback path.
    x2 = 3.0 * jax.random.normal(jax.random.PRNGKey(1), (3, 5, 7), dtype=jnp.float32)
    y2 = hardtanh(x2, min_val=-0.5, max_val=2.0)
    jax.block_until_ready(y2)
    ref2 = jnp.clip(x2, -0.5, 2.0)
    assert y2.shape == x2.shape and y2.dtype == x2.dtype
    assert jnp.allclose(y2, ref2), "mismatch vs reference (unaligned case)"

    print("KERNEL_OK")
</pallas_src>

<mosaic_0001>
module attributes {stable_mosaic.version = 11 : i64} {
  func.func @_hardtanh_kernel(%arg0: i32, %arg1: memref<8x256xf32, #tpu.memory_space<vmem>>, %arg2: memref<8x256xf32, #tpu.memory_space<vmem>>) attributes {dimension_semantics = [#tpu.dimension_semantics<parallel>], iteration_bounds = array<i64: 1>, scalar_prefetch = 0 : i64, scratch_operands = 0 : i64, tpu.core_type = #tpu.core_type<tc>, window_params = [{transform_indices = @transform_0, window_bounds = array<i64: 8, 256>}, {transform_indices = @transform_1, window_bounds = array<i64: 8, 256>}]} {
    %c0 = arith.constant 0 : index
    %c0_0 = arith.constant 0 : index
    %0 = vector.load %arg1[%c0, %c0_0] : memref<8x256xf32, #tpu.memory_space<vmem>>, vector<8x256xf32>
    %cst = arith.constant -1.000000e+00 : f32
    %1 = vector.broadcast %cst : f32 to vector<8x256xf32>
    %2 = arith.maximumf %0, %1 : vector<8x256xf32>
    %cst_1 = arith.constant 1.000000e+00 : f32
    %3 = vector.broadcast %cst_1 : f32 to vector<8x256xf32>
    %4 = arith.minimumf %2, %3 : vector<8x256xf32>
    %c0_2 = arith.constant 0 : index
    %c0_3 = arith.constant 0 : index
    %5 = vector.load %arg2[%c0_2, %c0_3] : memref<8x256xf32, #tpu.memory_space<vmem>>, vector<8x256xf32>
    tpu.vector_store %arg2[%c0_2, %c0_3], %4 {strides = array<i32>} : memref<8x256xf32, #tpu.memory_space<vmem>>, vector<8x256xf32>,
    return
  }
  func.func @transform_0(%arg0: i32) -> (i32, i32) {
    %c0_i32 = arith.constant 0 : i32
    %c0_i32_0 = arith.constant 0 : i32
    return %arg0, %c0_i32 : i32, i32
  }
  func.func @transform_1(%arg0: i32) -> (i32, i32) {
    %c0_i32 = arith.constant 0 : i32
    %c0_i32_0 = arith.constant 0 : i32
    return %arg0, %c0_i32 : i32, i32
  }
}

</mosaic_0001>

<llo_original>
// kernel: tpu_custom_call.1
$region0: #{tpu_custom_call.1}
  #allocation0 [shape = 'u32[]', space=smem, size = 0x4, offset = 0x4, fixed_abs, tag = 'smem constant byte address 0x4 - core index']
  #allocation1 [shape = 'u32[144,128]{1,0:T(1,128)}', space=vmem, size = 0x12000, scoped, tag = 'internal scratch']
  %s0 = inlined_call_operand.hbm [shape: f32[8,256], index: 0, kind: input, shape index: {}]
  %s1 = inlined_call_operand.hbm [shape: f32[8,256], index: 1, kind: output, shape index: {}]
  %s2 = sld [smem:[#allocation0]]
  $region18: #{tpu_custom_call.1} parent=0
    _
  %s4 = ssub.s32 1, %s2
  %s5 = scalar_select 0, %s4, %s2
  $region1: #{tpu_custom_call.1} parent=0
    #allocation2 [shape = 'u8[8192]{0}', space=vmem, size = 0x2000, scoped, tag = 'input window, operand 0, single buffered']
    #allocation3 [shape = 's32[1]{0}', space=sflag, size = 0x4, scoped, tag = 'scoped memory for tpu_custom_call.1']
    #allocation4 [shape = 's32[1]{0}', space=sflag, size = 0x4, scoped, tag = 'scoped memory for tpu_custom_call.1']
    #allocation5 [shape = 'u8[8192]{0}', space=vmem, size = 0x2000, scoped, tag = 'output window, operand 0, single buffered']
    %6 = vsyncpa [#allocation3], 0
    %7 = vsyncpa [#allocation4], 0
    // Predicated region
    $region2: #{tpu_custom_call.1} parent=1 // pred_check
      _
    $region3: #{tpu_custom_call.1} parent=1 // pred_check_branch
      %9 = sbr.rel (0) target = $region5
    $region4: #{tpu_custom_call.1} parent=1 // pred_region
      %s11 = ssub.s32 256, 256
      %12 = vsyncadd [#allocation3], %s11
      %s14 = sshll.u32 [#allocation2], 4
      %s15 = int_to_ptr.vmem [resolvable:$true] %s14
      %17 = dma.hbm_to_vmem [thread:$0]  %s0, 256, %s15, [#allocation3]
    $region5: #{tpu_custom_call.1} parent=1 // pred_fallthru
      _
    // Predicated region
    $region6: #{tpu_custom_call.1} parent=1 // pred_check
      _
    $region7: #{tpu_custom_call.1} parent=1 // pred_check_branch
      %19 = sbr.rel (0) target = $region9
    $region8: #{tpu_custom_call.1} parent=1 // pred_region
      %20 = dma.done [#allocation3], 256
    $region9: #{tpu_custom_call.1} parent=1 // pred_fallthru
      _
    %v21 = vld [vmem:[#allocation2] sm:$0xff]
    %v22 = vld [vmem:[#allocation2 + $0x8] sm:$0xff]
    %v23 = vmax.f32 %v21, -1.0
    %v24 = vmax.f32 %v22, -1.0
    %v25 = vmin.f32 %v23, 1.0
    %v26 = vmin.f32 %v24, 1.0
    %27 = vst [vmem:[#allocation5] sm:$0xff] %v25
    %28 = vst [vmem:[#allocation5 + $0x8] sm:$0xff] %v26
    // Predicated region
    $region10: #{tpu_custom_call.1} parent=1 // pred_check
      _
    $region11: #{tpu_custom_call.1} parent=1 // pred_check_branch
      %30 = sbr.rel (0) target = $region13
    $region12: #{tpu_custom_call.1} parent=1 // pred_region
      %s32 = ssub.s32 256, 256
      %33 = vsyncadd [#allocation4], %s32
      %s35 = sshll.u32 [#allocation5], 4
      %s36 = int_to_ptr.vmem [resolvable:$true] %s35
      %38 = dma.vmem_to_hbm [thread:$0]  %s36, 256, %s1, [#allocation4]
    $region13: #{tpu_custom_call.1} parent=1 // pred_fallthru
      _
    // Predicated region
    $region14: #{tpu_custom_call.1} parent=1 // pred_check
      _
    $region15: #{tpu_custom_call.1} parent=1 // pred_check_branch
      %40 = sbr.rel (0) target = $region17
    $region16: #{tpu_custom_call.1} parent=1 // pred_region
      %41 = dma.done [#allocation4], 256
    $region17: #{tpu_custom_call.1} parent=1 // pred_fallthru
      _
    %42 = vsyncpa [#allocation3], 1
    %43 = vsyncpa [#allocation4], 1

</llo_original>
